<compile_context>
chip_gen: v5e
topology: v5e:2x2
jax: 0.10.0
libtpu: 0.0.40
codegen_flags: <defaults>
</compile_context>

<pallas_src>
import jax
import jax.numpy as jnp
from jax.experimental import pallas as pl
from jax.experimental.pallas import tpu as pltpu

BN_EPS = 1e-5          # PyTorch BatchNorm1d default eps
H1, H2 = 100, 50       # logical hidden widths (PyTorch module)
H1P, H2P = 128, 128    # lane-padded hidden widths used in-kernel


def mlp_kernel(x_ref, w1_ref, b1_ref, w2_ref, b2_ref, w3_ref, b3_ref, o_ref):
    """Eval-mode forward on one batch tile.
    BN is pre-folded into (w1,b1)/(w2,b2); Dropout is identity in eval mode.
    Hidden dims are zero-padded to 128 lanes; the final Linear(50,1) is computed
    as a lane-dense (1, tb) row via an MXU contraction over the lane axis."""
    x = x_ref[...]                                                        # (tb, D)

    # Linear(D,100) + BN(100) folded, padded to 128 output lanes.
    h = jnp.dot(x, w1_ref[...], preferred_element_type=jnp.float32) + b1_ref[...]
    h = jnp.maximum(h, 0.0)                                               # ReLU
    # TODO(synk): training-mode Dropout(0.5) would use pltpu.prng_seed/prng_random_bits;
    # it is the identity in eval mode.

    # Linear(100,50) + BN(50) folded, padded to 128x128.
    h = jnp.dot(h, w2_ref[...], preferred_element_type=jnp.float32) + b2_ref[...]
    h = jnp.maximum(h, 0.0)                                               # (tb, 128)

    # Linear(50,1): contract lanes of h against the padded w3 row.
    # w3_ref is (8, 128) with only row 0 holding real weights (rows 1..7 zero) so
    # both MXU operands are (8,128)/(tb,128)-aligned; result row 0 is (1, tb).
    z = jax.lax.dot_general(w3_ref[...], h, (((1,), (1,)), ((), ())),
                            preferred_element_type=jnp.float32)           # (8, tb)
    o_ref[...] = jax.nn.sigmoid(z[0:1, :] + b3_ref[...])                  # (1, tb)


def init_params(key, input_dim):
    """PyTorch-convention parameters (Linear weights stored as (in, out)).
    Linear init mimics PyTorch defaults; BN stats are made non-trivial so the
    BN-folding path is actually exercised by the correctness check."""
    dims = [(input_dim, H1), (H1, H2), (H2, 1)]
    keys = jax.random.split(key, 2 * len(dims) + 8)
    params = {}
    for li, (fan_in, fan_out) in enumerate(dims, start=1):
        bound = 1.0 / jnp.sqrt(jnp.float32(fan_in))
        params[f"w{li}"] = jax.random.uniform(keys[2 * (li - 1)], (fan_in, fan_out),
                                              jnp.float32, -bound, bound)
        params[f"b{li}"] = jax.random.uniform(keys[2 * (li - 1) + 1], (1, fan_out),
                                              jnp.float32, -bound, bound)
    bn_keys = keys[2 * len(dims):]
    for idx, (bi, h) in enumerate([(1, H1), (2, H2)]):
        k0, k1, k2, k3 = bn_keys[4 * idx:4 * idx + 4]
        params[f"g{bi}"] = jax.random.uniform(k0, (1, h), jnp.float32, 0.5, 1.5)   # gamma
        params[f"be{bi}"] = 0.1 * jax.random.normal(k1, (1, h), jnp.float32)       # beta
        params[f"m{bi}"] = 0.1 * jax.random.normal(k2, (1, h), jnp.float32)        # running mean
        params[f"v{bi}"] = jax.random.uniform(k3, (1, h), jnp.float32, 0.5, 1.5)   # running var
    return params


def fold_and_pad(p):
    """Fold eval-mode BN into the preceding Linear and zero-pad hidden dims to 128.
    W' = W * (gamma*rsqrt(var+eps)),  b' = (b - mean)*gamma*rsqrt(var+eps) + beta.
    Padded bias/weight entries are zero, so ReLU(0)=0 and zero matmul rows keep
    padded lanes inert."""
    def fold(w, b, g, be, m, v):
        s = g * jax.lax.rsqrt(v + BN_EPS)          # (1, out)
        return w * s, (b - m) * s + be

    w1, b1 = fold(p["w1"], p["b1"], p["g1"], p["be1"], p["m1"], p["v1"])
    w2, b2 = fold(p["w2"], p["b2"], p["g2"], p["be2"], p["m2"], p["v2"])
    D = w1.shape[0]

    w1p = jnp.zeros((D, H1P), jnp.float32).at[:, :H1].set(w1)
    b1p = jnp.zeros((1, H1P), jnp.float32).at[:, :H1].set(b1)
    w2p = jnp.zeros((H1P, H2P), jnp.float32).at[:H1, :H2].set(w2)
    b2p = jnp.zeros((1, H2P), jnp.float32).at[:, :H2].set(b2)
    # Final layer weights as a sublane-padded row block: only row 0 is real.
    w3p = jnp.zeros((8, H2P), jnp.float32).at[0, :H2].set(p["w3"][:, 0])
    b3 = p["b3"].reshape(1, 1)
    return dict(w1=w1p, b1=b1p, w2=w2p, b2=b2p, w3=w3p, b3=b3)


def _choose_batch_tile(B):
    """Largest lane-aligned (multiple of 128) tile dividing B that keeps >=2 grid
    steps (so both v7x TensorCores get work); fall back to the whole batch."""
    for cand in (2048, 1024, 512, 256, 128):
        if B % cand == 0 and B // cand >= 2:
            return cand
    return B


def neural_network_forward(x, params, tb=None):
    """Pallas forward. Tiles over the batch dimension; all (folded, padded)
    parameters are tiny and fully resident in VMEM for every grid step."""
    B, D = x.shape
    if tb is None:
        tb = _choose_batch_tile(B)
    assert B % tb == 0, "batch must be a multiple of the batch tile (pad the batch)"
    assert tb == B or tb % 128 == 0, "batch tile must be a multiple of 128 (or the full batch)"

    kp = fold_and_pad(params)

    def full(arr):
        return pl.BlockSpec(arr.shape, lambda i: (0, 0))

    in_specs = [
        pl.BlockSpec((tb, D), lambda i: (i, 0)),    # x batch tile
        full(kp["w1"]), full(kp["b1"]),
        full(kp["w2"]), full(kp["b2"]),
        full(kp["w3"]), full(kp["b3"]),
    ]
    # Lane-dense output: (1, B) written as full-lane (1, tb) rows.
    out_spec = pl.BlockSpec((1, tb), lambda i: (0, i))

    out = pl.pallas_call(
        mlp_kernel,
        out_shape=jax.ShapeDtypeStruct((1, B), jnp.float32),
        grid_spec=pltpu.PrefetchScalarGridSpec(
            num_scalar_prefetch=0,
            grid=(B // tb,),
            in_specs=in_specs,
            out_specs=out_spec,
        ),
        compiler_params=pltpu.CompilerParams(
            dimension_semantics=("parallel",)),
    )(x, kp["w1"], kp["b1"], kp["w2"], kp["b2"], kp["w3"], kp["b3"])

    # (1, B) -> (B, 1): contiguous reshape, no transpose / extra HBM pass.
    return out.reshape(B, 1)


def reference_forward(x, p):
    """Pure-JAX reference of the same eval-mode forward (unfolded BN)."""
    h = x @ p["w1"] + p["b1"]
    h = (h - p["m1"]) / jnp.sqrt(p["v1"] + BN_EPS) * p["g1"] + p["be1"]
    h = jnp.maximum(h, 0.0)
    h = h @ p["w2"] + p["b2"]
    h = (h - p["m2"]) / jnp.sqrt(p["v2"] + BN_EPS) * p["g2"] + p["be2"]
    h = jnp.maximum(h, 0.0)
    z = h @ p["w3"] + p["b3"]
    return jax.nn.sigmoid(z)


if __name__ == "__main__":
    key = jax.random.PRNGKey(0)
    kx, kparam = jax.random.split(key)

    batch, input_dim = 512, 32           # small; auto tile -> tb=256, grid=(2,)
    x = jax.random.normal(kx, (batch, input_dim), jnp.float32)
    params = init_params(kparam, input_dim)

    out = neural_network_forward(x, params)
    out = jax.block_until_ready(out)

    ref = reference_forward(x, params)
    assert out.shape == (batch, 1)
    assert jnp.allclose(out, ref, atol=2e-5, rtol=2e-5), "Pallas output mismatch vs reference"

    print("KERNEL_OK")
</pallas_src>

<mosaic_0001>
module attributes {stable_mosaic.version = 11 : i64} {
  func.func @mlp_kernel(%arg0: i32, %arg1: memref<256x32xf32, #tpu.memory_space<vmem>>, %arg2: memref<32x128xf32, #tpu.memory_space<vmem>>, %arg3: memref<1x128xf32, #tpu.memory_space<vmem>>, %arg4: memref<128x128xf32, #tpu.memory_space<vmem>>, %arg5: memref<1x128xf32, #tpu.memory_space<vmem>>, %arg6: memref<8x128xf32, #tpu.memory_space<vmem>>, %arg7: memref<1x1xf32, #tpu.memory_space<vmem>>, %arg8: memref<1x256xf32, #tpu.memory_space<vmem>>) attributes {dimension_semantics = [#tpu.dimension_semantics<parallel>], iteration_bounds = array<i64: 2>, scalar_prefetch = 0 : i64, scratch_operands = 0 : i64, tpu.core_type = #tpu.core_type<tc>, window_params = [{transform_indices = @transform_0, window_bounds = array<i64: 256, 32>}, {pipeline_mode = #tpu.pipeline_mode<synchronous>, transform_indices = @transform_1, window_bounds = array<i64: 32, 128>}, {pipeline_mode = #tpu.pipeline_mode<synchronous>, transform_indices = @transform_2, window_bounds = array<i64: 1, 128>}, {pipeline_mode = #tpu.pipeline_mode<synchronous>, transform_indices = @transform_3, window_bounds = array<i64: 128, 128>}, {pipeline_mode = #tpu.pipeline_mode<synchronous>, transform_indices = @transform_4, window_bounds = array<i64: 1, 128>}, {pipeline_mode = #tpu.pipeline_mode<synchronous>, transform_indices = @transform_5, window_bounds = array<i64: 8, 128>}, {pipeline_mode = #tpu.pipeline_mode<synchronous>, transform_indices = @transform_6, window_bounds = array<i64: 1, 1>}, {transform_indices = @transform_7, window_bounds = array<i64: 1, 256>}]} {
    %c0 = arith.constant 0 : index
    %c0_0 = arith.constant 0 : index
    %0 = vector.load %arg1[%c0, %c0_0] : memref<256x32xf32, #tpu.memory_space<vmem>>, vector<256x32xf32>
    %c0_1 = arith.constant 0 : index
    %c0_2 = arith.constant 0 : index
    %1 = vector.load %arg2[%c0_1, %c0_2] : memref<32x128xf32, #tpu.memory_space<vmem>>, vector<32x128xf32>
    %cst = arith.constant dense<0.000000e+00> : vector<256x128xf32>
    %2 = tpu.matmul %0, %1, %cst {dimension_numbers = #tpu.dot_dimension_numbers<[1], [0], [0], [1], [0, 0, 1, 1], [], []>} : vector<256x32xf32>, vector<32x128xf32>, vector<256x128xf32> -> vector<256x128xf32>
    %c0_3 = arith.constant 0 : index
    %c0_4 = arith.constant 0 : index
    %3 = vector.load %arg3[%c0_3, %c0_4] : memref<1x128xf32, #tpu.memory_space<vmem>>, vector<1x128xf32>
    %4 = vector.broadcast %3 : vector<1x128xf32> to vector<256x128xf32>
    %5 = arith.addf %2, %4 : vector<256x128xf32>
    %cst_5 = arith.constant 0.000000e+00 : f32
    %6 = vector.broadcast %cst_5 : f32 to vector<256x128xf32>
    %7 = arith.maximumf %5, %6 : vector<256x128xf32>
    %c0_6 = arith.constant 0 : index
    %c0_7 = arith.constant 0 : index
    %8 = vector.load %arg4[%c0_6, %c0_7] : memref<128x128xf32, #tpu.memory_space<vmem>>, vector<128x128xf32>
    %cst_8 = arith.constant dense<0.000000e+00> : vector<256x128xf32>
    %9 = tpu.matmul %7, %8, %cst_8 {dimension_numbers = #tpu.dot_dimension_numbers<[1], [0], [0], [1], [0, 0, 1, 1], [], []>} : vector<256x128xf32>, vector<128x128xf32>, vector<256x128xf32> -> vector<256x128xf32>
    %c0_9 = arith.constant 0 : index
    %c0_10 = arith.constant 0 : index
    %10 = vector.load %arg5[%c0_9, %c0_10] : memref<1x128xf32, #tpu.memory_space<vmem>>, vector<1x128xf32>
    %11 = vector.broadcast %10 : vector<1x128xf32> to vector<256x128xf32>
    %12 = arith.addf %9, %11 : vector<256x128xf32>
    %cst_11 = arith.constant 0.000000e+00 : f32
    %13 = vector.broadcast %cst_11 : f32 to vector<256x128xf32>
    %14 = arith.maximumf %12, %13 : vector<256x128xf32>
    %c0_12 = arith.constant 0 : index
    %c0_13 = arith.constant 0 : index
    %15 = vector.load %arg6[%c0_12, %c0_13] : memref<8x128xf32, #tpu.memory_space<vmem>>, vector<8x128xf32>
    %cst_14 = arith.constant dense<0.000000e+00> : vector<8x256xf32>
    %16 = tpu.matmul %15, %14, %cst_14 {dimension_numbers = #tpu.dot_dimension_numbers<[1], [1], [0], [0], [0, 0, 1, 0], [], []>} : vector<8x128xf32>, vector<256x128xf32>, vector<8x256xf32> -> vector<8x256xf32>
    %17 = vector.extract_strided_slice %16 {offsets = [0, 0], sizes = [1, 256], strides = [1, 1]} : vector<8x256xf32> to vector<1x256xf32>
    %c0_15 = arith.constant 0 : index
    %c0_16 = arith.constant 0 : index
    %18 = vector.load %arg7[%c0_15, %c0_16] : memref<1x1xf32, #tpu.memory_space<vmem>>, vector<1x1xf32>
    %19 = vector.broadcast %18 : vector<1x1xf32> to vector<1x256xf32>
    %20 = arith.addf %17, %19 : vector<1x256xf32>
    %21 = arith.negf %20 : vector<1x256xf32>
    %22 = math.exp %21 : vector<1x256xf32>
    %cst_17 = arith.constant 1.000000e+00 : f32
    %23 = vector.broadcast %cst_17 : f32 to vector<1x256xf32>
    %24 = arith.addf %23, %22 : vector<1x256xf32>
    %25 = arith.divf %23, %24 : vector<1x256xf32>
    %c0_18 = arith.constant 0 : index
    %c0_19 = arith.constant 0 : index
    %26 = vector.load %arg8[%c0_18, %c0_19] : memref<1x256xf32, #tpu.memory_space<vmem>>, vector<1x256xf32>
    tpu.vector_store %arg8[%c0_18, %c0_19], %25 {strides = array<i32>} : memref<1x256xf32, #tpu.memory_space<vmem>>, vector<1x256xf32>,
    return
  }
  func.func @transform_0(%arg0: i32) -> (i32, i32) {
    %c0_i32 = arith.constant 0 : i32
    %c0_i32_0 = arith.constant 0 : i32
    return %arg0, %c0_i32 : i32, i32
  }
  func.func @transform_1(%arg0: i32) -> (i32, i32) {
    %c0_i32 = arith.constant 0 : i32
    %c0_i32_0 = arith.constant 0 : i32
    %c0_i32_1 = arith.constant 0 : i32
    return %c0_i32, %c0_i32_0 : i32, i32
  }
  func.func @transform_2(%arg0: i32) -> (i32, i32) {
    %c0_i32 = arith.constant 0 : i32
    %c0_i32_0 = arith.constant 0 : i32
    %c0_i32_1 = arith.constant 0 : i32
    return %c0_i32, %c0_i32_0 : i32, i32
  }
  func.func @transform_3(%arg0: i32) -> (i32, i32) {
    %c0_i32 = arith.constant 0 : i32
    %c0_i32_0 = arith.constant 0 : i32
    %c0_i32_1 = arith.constant 0 : i32
    return %c0_i32, %c0_i32_0 : i32, i32
  }
  func.func @transform_4(%arg0: i32) -> (i32, i32) {
    %c0_i32 = arith.constant 0 : i32
    %c0_i32_0 = arith.constant 0 : i32
    %c0_i32_1 = arith.constant 0 : i32
    return %c0_i32, %c0_i32_0 : i32, i32
  }
  func.func @transform_5(%arg0: i32) -> (i32, i32) {
    %c0_i32 = arith.constant 0 : i32
    %c0_i32_0 = arith.constant 0 : i32
    %c0_i32_1 = arith.constant 0 : i32
    return %c0_i32, %c0_i32_0 : i32, i32
  }
  func.func @transform_6(%arg0: i32) -> (i32, i32) {
    %c0_i32 = arith.constant 0 : i32
    %c0_i32_0 = arith.constant 0 : i32
    %c0_i32_1 = arith.constant 0 : i32
    return %c0_i32, %c0_i32_0 : i32, i32
  }
  func.func @transform_7(%arg0: i32) -> (i32, i32) {
    %c0_i32 = arith.constant 0 : i32
    %c0_i32_0 = arith.constant 0 : i32
    return %c0_i32, %arg0 : i32, i32
  }
}

</mosaic_0001>

<llo_original>
// kernel: tpu_custom_call.1
$region0: #{tpu_custom_call.1}
  #allocation0 [shape = 'u32[]', space=smem, size = 0x4, offset = 0x4, fixed_abs, tag = 'smem constant byte address 0x4 - core index']
  #allocation1 [shape = 'u32[72,128]{1,0:T(1,128)}', space=vmem, size = 0x9000, scoped, tag = 'internal scratch']
  #allocation2 [shape = 'f32[1,1]{1,0:T(1,128)S(1)}', space=vmem, size = 0x200, scoped, tag = 'scoped memory for tpu_custom_call.1']
  %s0 = inlined_call_operand.vmem [shape: f32[512,32], index: 0, kind: input, shape index: {}]
  %s1 = inlined_call_operand.vmem [shape: f32[32,128], index: 1, kind: input, shape index: {}]
  %s2 = inlined_call_operand.vmem [shape: f32[1,128], index: 2, kind: input, shape index: {}]
  %s3 = inlined_call_operand.vmem [shape: f32[128,128], index: 3, kind: input, shape index: {}]
  %s4 = inlined_call_operand.vmem [shape: f32[1,128], index: 4, kind: input, shape index: {}]
  %s5 = inlined_call_operand.vmem [shape: f32[8,128], index: 5, kind: input, shape index: {}]
  %s6 = inlined_call_operand.<no memory space> [shape: f32[1,1], index: 6, kind: input, shape index: {}]
  %s7 = inlined_call_operand.hbm [shape: f32[1,512], index: 7, kind: output, shape index: {}]
  %s8 = sld [smem:[#allocation0]]
  $region61: #{tpu_custom_call.1} parent=0
    _
  %s10 = ssub.s32 1, %s8
  %s11 = scalar_select 0, %s10, %s8
  %v12 = vstv %s6
  %13 = vst [vmem:[#allocation2] sm:$0x1] %v12
  $region1: #{tpu_custom_call.1} parent=0
    #allocation3 [shape = 'u8[2048]{0}', space=vmem, size = 0x800, scoped, tag = 'output window, operand 0']
    #allocation4 [shape = 's32[2]{0}', space=sflag, size = 0x8, scoped, tag = 'scoped memory for tpu_custom_call.1']
    %14 = vsyncpa [#allocation4], 0
    %s15 = scalar_lea.sflag [#allocation4], 1
    %16 = vsyncpa %s15, 0
    loop: start=0, step=1, limit=4
    $region2: #{tpu_custom_call.1} parent=1 // loop_pre_header
      _
    $region3: #{tpu_custom_call.1} parent=1 // loop_header
      %s18 = sphi 0, %s22
      %p19 = scmp.ge.s32.totalorder %s18, 4
      %s28 = sphi 0, %s30
      %s31 = sphi 0, %s28
      %s32 = sphi 0, %s31
      %s48 = sphi 0, %s32
      %s52 = sphi 0, %s52
      %s54 = sphi 0, %s52
      %s55 = sphi 0, %s54
      %s69 = sphi 0, %s55
      %s73 = sphi 0, %s73
      %s75 = sphi 0, %s73
      %s76 = sphi 0, %s75
      %s90 = sphi 0, %s76
      %s94 = sphi 0, %s94
      %s96 = sphi 0, %s94
      %s97 = sphi 0, %s96
      %s111 = sphi 0, %s97
      %s115 = sphi 0, %s115
      %s117 = sphi 0, %s115
      %s118 = sphi 0, %s117
      %s132 = sphi 0, %s118
      %s136 = sphi 0, %s136
      %s138 = sphi 0, %s136
      %s139 = sphi 0, %s138
      %s153 = sphi 0, %s139
      %s157 = sphi 0, %s157
      %s159 = sphi 0, %s157
      %s160 = sphi 0, %s159
      %s174 = sphi 0, %s160
      %s180 = sphi 0, %s182
      %s183 = sphi 0, %s180
      %s184 = sphi 0, %s183
      %s200 = sphi 0, %s184
    $region4: #{tpu_custom_call.1} parent=1 // loop_header_branch
      %21 = sbr.rel (%p19) target = $region8
    $region5: #{tpu_custom_call.1} parent=1 // loop_body
      %s23 = ssub.s32 %s18, 1
      %s24 = ssub.s32 %s18, 2
      %s25 = sadd.s32 %s18, 1
      %s26 = ssub.s32 %s18, %s25
      %p27 = scmp.eq.s32.totalorder %s26, 0
      %s29 = sadd.s32 %s28, 1
      %s30 = scalar_select %p27, %s28, %s29
      %p33 = pneg %p27
      %p34 = scmp.eq.s32.totalorder %s18, 1
      %p35 = por %p33, %p34
      %p36 = scmp.ne.s32.totalorder %s28, %s31
      %p37 = scmp.eq.s32.totalorder %s18, 0
      %p38 = por %p36, %p37
      %p39 = scmp.ne.s32.totalorder %s28, %s31
      %p40 = scmp.eq.s32.totalorder %s23, 1
      %p41 = por %p39, %p40
      %p42 = scmp.ne.s32.totalorder %s31, %s32
      %p43 = scmp.eq.s32.totalorder %s23, 0
      %p44 = por %p42, %p43
      %p45 = scmp.ne.s32.totalorder %s31, %s32
      %p46 = scmp.eq.s32.totalorder %s24, 1
      %p47 = por %p45, %p46
      %p49 = scmp.ne.s32.totalorder %s32, %s48
      %p50 = scmp.eq.s32.totalorder %s24, 0
      %p51 = por %p49, %p50
      %s53 = sadd.s32 %s52, 1
      %p56 = scmp.eq.s32.totalorder %s18, 1
      %p57 = scmp.ne.s32.totalorder %s52, %s54
      %p58 = scmp.eq.s32.totalorder %s18, 0
      %p59 = por %p57, %p58
      %p60 = scmp.ne.s32.totalorder %s52, %s54
      %p61 = scmp.eq.s32.totalorder %s23, 1
      %p62 = por %p60, %p61
      %p63 = scmp.ne.s32.totalorder %s54, %s55
      %p64 = scmp.eq.s32.totalorder %s23, 0
      %p65 = por %p63, %p64
      %p66 = scmp.ne.s32.totalorder %s54, %s55
      %p67 = scmp.eq.s32.totalorder %s24, 1
      %p68 = por %p66, %p67
      %p70 = scmp.ne.s32.totalorder %s55, %s69
      %p71 = scmp.eq.s32.totalorder %s24, 0
      %p72 = por %p70, %p71
      %s74 = sadd.s32 %s73, 1
      %p77 = scmp.eq.s32.totalorder %s18, 1
      %p78 = scmp.ne.s32.totalorder %s73, %s75
      %p79 = scmp.eq.s32.totalorder %s18, 0
      %p80 = por %p78, %p79
      %p81 = scmp.ne.s32.totalorder %s73, %s75
      %p82 = scmp.eq.s32.totalorder %s23, 1
      %p83 = por %p81, %p82
      %p84 = scmp.ne.s32.totalorder %s75, %s76
      %p85 = scmp.eq.s32.totalorder %s23, 0
      %p86 = por %p84, %p85
      %p87 = scmp.ne.s32.totalorder %s75, %s76
      %p88 = scmp.eq.s32.totalorder %s24, 1
      %p89 = por %p87, %p88
      %p91 = scmp.ne.s32.totalorder %s76, %s90
      %p92 = scmp.eq.s32.totalorder %s24, 0
      %p93 = por %p91, %p92
      %s95 = sadd.s32 %s94, 1
      %p98 = scmp.eq.s32.totalorder %s18, 1
      %p99 = scmp.ne.s32.totalorder %s94, %s96
      %p100 = scmp.eq.s32.totalorder %s18, 0
      %p101 = por %p99, %p100
      %p102 = scmp.ne.s32.totalorder %s94, %s96
      %p103 = scmp.eq.s32.totalorder %s23, 1
      %p104 = por %p102, %p103
      %p105 = scmp.ne.s32.totalorder %s96, %s97
      %p106 = scmp.eq.s32.totalorder %s23, 0
      %p107 = por %p105, %p106
      %p108 = scmp.ne.s32.totalorder %s96, %s97
      %p109 = scmp.eq.s32.totalorder %s24, 1
      %p110 = por %p108, %p109
      %p112 = scmp.ne.s32.totalorder %s97, %s111
      %p113 = scmp.eq.s32.totalorder %s24, 0
      %p114 = por %p112, %p113
      %s116 = sadd.s32 %s115, 1
      %p119 = scmp.eq.s32.totalorder %s18, 1
      %p120 = scmp.ne.s32.totalorder %s115, %s117
      %p121 = scmp.eq.s32.totalorder %s18, 0
      %p122 = por %p120, %p121
      %p123 = scmp.ne.s32.totalorder %s115, %s117
      %p124 = scmp.eq.s32.totalorder %s23, 1
      %p125 = por %p123, %p124
      %p126 = scmp.ne.s32.totalorder %s117, %s118
      %p127 = scmp.eq.s32.totalorder %s23, 0
      %p128 = por %p126, %p127
      %p129 = scmp.ne.s32.totalorder %s117, %s118
      %p130 = scmp.eq.s32.totalorder %s24, 1
      %p131 = por %p129, %p130
      %p133 = scmp.ne.s32.totalorder %s118, %s132
      %p134 = scmp.eq.s32.totalorder %s24, 0
      %p135 = por %p133, %p134
      %s137 = sadd.s32 %s136, 1
      %p140 = scmp.eq.s32.totalorder %s18, 1
      %p141 = scmp.ne.s32.totalorder %s136, %s138
      %p142 = scmp.eq.s32.totalorder %s18, 0
      %p143 = por %p141, %p142
      %p144 = scmp.ne.s32.totalorder %s136, %s138
      %p145 = scmp.eq.s32.totalorder %s23, 1
      %p146 = por %p144, %p145
      %p147 = scmp.ne.s32.totalorder %s138, %s139
      %p148 = scmp.eq.s32.totalorder %s23, 0
      %p149 = por %p147, %p148
      %p150 = scmp.ne.s32.totalorder %s138, %s139
      %p151 = scmp.eq.s32.totalorder %s24, 1
      %p152 = por %p150, %p151
      %p154 = scmp.ne.s32.totalorder %s139, %s153
      %p155 = scmp.eq.s32.totalorder %s24, 0
      %p156 = por %p154, %p155
      %s158 = sadd.s32 %s157, 1
      %p161 = scmp.eq.s32.totalorder %s18, 1
      %p162 = scmp.ne.s32.totalorder %s157, %s159
      %p163 = scmp.eq.s32.totalorder %s18, 0
      %p164 = por %p162, %p163
      %p165 = scmp.ne.s32.totalorder %s157, %s159
      %p166 = scmp.eq.s32.totalorder %s23, 1
      %p167 = por %p165, %p166
      %p168 = scmp.ne.s32.totalorder %s159, %s160
      %p169 = scmp.eq.s32.totalorder %s23, 0
      %p170 = por %p168, %p169
      %p171 = scmp.ne.s32.totalorder %s159, %s160
      %p172 = scmp.eq.s32.totalorder %s24, 1
      %p173 = por %p171, %p172
      %p175 = scmp.ne.s32.totalorder %s160, %s174
      %p176 = scmp.eq.s32.totalorder %s24, 0
      %p177 = por %p175, %p176
      %s178 = ssub.s32 %s18, %s25
      %p179 = scmp.eq.s32.totalorder %s178, 0
      %s181 = sadd.s32 %s180, 1
      %s182 = scalar_select %p179, %s180, %s181
      %p185 = pneg %p179
      %p186 = scmp.eq.s32.totalorder %s18, 1
      %p187 = por %p185, %p186
      %p188 = scmp.ne.s32.totalorder %s180, %s183
      %p189 = scmp.eq.s32.totalorder %s18, 0
      %p190 = por %p188, %p189
      %p191 = scmp.ne.s32.totalorder %s180, %s183
      %p192 = scmp.eq.s32.totalorder %s23, 1
      %p193 = por %p191, %p192
      %p194 = scmp.ne.s32.totalorder %s183, %s184
      %p195 = scmp.eq.s32.totalorder %s23, 0
      %p196 = por %p194, %p195
      %p197 = scmp.ne.s32.totalorder %s183, %s184
      %p198 = scmp.eq.s32.totalorder %s24, 1
      %p199 = por %p197, %p198
      %p201 = scmp.ne.s32.totalorder %s184, %s200
      %p202 = scmp.eq.s32.totalorder %s24, 0
      %p203 = por %p201, %p202
      %p204 = scmp.le.s32.totalorder 1, %s18
      %p205 = scmp.lt.s32.totalorder %s18, 3
      %p206 = pnand %p204, %p205
      %p207 = pneg %p206
      // Predicated region
      $region9: #{tpu_custom_call.1} parent=5 // pred_check
        _
      $region10: #{tpu_custom_call.1} parent=5 // pred_check_branch
        %209 = sbr.rel (%p206) target = $region12
      $region11: #{tpu_custom_call.1} parent=5 // pred_region
        %s210 = ssub.s32 %s18, 1
        // Predicated region
        $region13: #{tpu_custom_call.1} parent=11 // pred_check
          %p211 = pneg %p65
        $region14: #{tpu_custom_call.1} parent=11 // pred_check_branch
          %213 = sbr.rel (%p211) target = $region16
        $region15: #{tpu_custom_call.1} parent=11 // pred_region
          _
        $region16: #{tpu_custom_call.1} parent=11 // pred_fallthru
          _
        // Predicated region
        $region17: #{tpu_custom_call.1} parent=11 // pred_check
          %p214 = pneg %p86
        $region18: #{tpu_custom_call.1} parent=11 // pred_check_branch
          %216 = sbr.rel (%p214) target = $region20
        $region19: #{tpu_custom_call.1} parent=11 // pred_region
          _
        $region20: #{tpu_custom_call.1} parent=11 // pred_fallthru
          _
        // Predicated region
        $region21: #{tpu_custom_call.1} parent=11 // pred_check
          %p217 = pneg %p107
        $region22: #{tpu_custom_call.1} parent=11 // pred_check_branch
          %219 = sbr.rel (%p217) target = $region24
        $region23: #{tpu_custom_call.1} parent=11 // pred_region
          _
        $region24: #{tpu_custom_call.1} parent=11 // pred_fallthru
          _
        // Predicated region
        $region25: #{tpu_custom_call.1} parent=11 // pred_check
          %p220 = pneg %p128
        $region26: #{tpu_custom_call.1} parent=11 // pred_check_branch
          %222 = sbr.rel (%p220) target = $region28
        $region27: #{tpu_custom_call.1} parent=11 // pred_region
          _
        $region28: #{tpu_custom_call.1} parent=11 // pred_fallthru
          _
        // Predicated region
        $region29: #{tpu_custom_call.1} parent=11 // pred_check
          %p223 = pneg %p149
        $region30: #{tpu_custom_call.1} parent=11 // pred_check_branch
          %225 = sbr.rel (%p223) target = $region32
        $region31: #{tpu_custom_call.1} parent=11 // pred_region
          _
        $region32: #{tpu_custom_call.1} parent=11 // pred_fallthru
          _
        // Predicated region
        $region33: #{tpu_custom_call.1} parent=11 // pred_check
          %p226 = pneg %p170
        $region34: #{tpu_custom_call.1} parent=11 // pred_check_branch
          %228 = sbr.rel (%p226) target = $region36
        $region35: #{tpu_custom_call.1} parent=11 // pred_region
          _
        $region36: #{tpu_custom_call.1} parent=11 // pred_fallthru
          _
      $region12: #{tpu_custom_call.1} parent=5 // pred_fallthru
        _
      %p229 = scmp.lt.s32.totalorder %s18, 2
      // Predicated region
      $region37: #{tpu_custom_call.1} parent=5 // pred_check
        %p230 = pneg %p229
      $region38: #{tpu_custom_call.1} parent=5 // pred_check_branch
        %232 = sbr.rel (%p230) target = $region40
      $region39: #{tpu_custom_call.1} parent=5 // pred_region
        // Predicated region
        $region41: #{tpu_custom_call.1} parent=39 // pred_check
          %p233 = pneg %p38
        $region42: #{tpu_custom_call.1} parent=39 // pred_check_branch
          %235 = sbr.rel (%p233) target = $region44
        $region43: #{tpu_custom_call.1} parent=39 // pred_region
          %s236 = smul.u32 32, %s18
          %p237 = scmp.lt.s32.totalorder %s236, 63
          %s238 = scalar_select %p237, %s236, 63
          %s239 = smul.addr %s238, 8
          %s240 = scalar_lea.vmem %s0, %s239
          %s241 = smul.u32 32, %s18
        $region44: #{tpu_custom_call.1} parent=39 // pred_fallthru
          _
      $region40: #{tpu_custom_call.1} parent=5 // pred_fallthru
        _
      %p242 = scmp.le.s32.totalorder 1, %s18
      %p243 = scmp.lt.s32.totalorder %s18, 3
      %p244 = pnand %p242, %p243
      %p245 = pneg %p244
      // Predicated region
      $region45: #{tpu_custom_call.1} parent=5 // pred_check
        _
      $region46: #{tpu_custom_call.1} parent=5 // pred_check_branch
        %247 = sbr.rel (%p244) target = $region48
      $region47: #{tpu_custom_call.1} parent=5 // pred_region
        %s248 = ssub.s32 %s18, 1
        %s249 = smul.u32 32, %s23
        %p250 = scmp.lt.s32.totalorder %s249, 63
        %s251 = scalar_select %p250, %s249, 63
        %s252 = smul.addr %s251, 8
        %s253 = scalar_lea.vmem %s0, %s252
        %p254 = pneg %p44
        %p255 = pneg %p41
        %p256 = pneg %p65
        %p257 = pneg %p62
        %p258 = pneg %p86
        %p259 = pneg %p83
        %p260 = pneg %p107
        %p261 = pneg %p104
        %p262 = pneg %p128
        %p263 = pneg %p125
        %p264 = pneg %p149
        %p265 = pneg %p146
        %p266 = pneg %p170
        %p267 = pneg %p167
        %p268 = pneg %p196
        %p269 = pneg %p193
        %s270 = sand.u32 %s183, 1
        %s271 = scalar_lea.sflag [#allocation4], %s270
        %s272 = sand.u32 %s183, 1
        %s273 = smul.addr %s272, 2
        %s274 = scalar_lea.vmem [#allocation3], %s273
        %s275 = smul.u32 32, %s23
        %p276 = scmp.lt.s32.totalorder %s275, 63
        %s277 = scalar_select %p276, %s275, 63
        %s278 = smul.addr %s277, 8
        %s279 = scalar_lea.vmem %s0, %s278
        %s280 = smul.u32 32, %s23
        %s281 = smul.u32 2, %s23
        %v282 = vld [vmem:[%s279] sm:$0xff]
        %v283 = vld [vmem:[%s279 + $0x8] sm:$0xff]
        %v284 = vld [vmem:[%s279 + $0x10] sm:$0xff]
        %v285 = vld [vmem:[%s279 + $0x18] sm:$0xff]
        %v286 = vld [vmem:[%s279 + $0x20] sm:$0xff]
        %v287 = vld [vmem:[%s279 + $0x28] sm:$0xff]
        %v288 = vld [vmem:[%s279 + $0x30] sm:$0xff]
        %v289 = vld [vmem:[%s279 + $0x38] sm:$0xff]
        %v290 = vld [vmem:[%s279 + $0x40] sm:$0xff]
        %v291 = vld [vmem:[%s279 + $0x48] sm:$0xff]
        %v292 = vld [vmem:[%s279 + $0x50] sm:$0xff]
        %v293 = vld [vmem:[%s279 + $0x58] sm:$0xff]
        %v294 = vld [vmem:[%s279 + $0x60] sm:$0xff]
        %v295 = vld [vmem:[%s279 + $0x68] sm:$0xff]
        %v296 = vld [vmem:[%s279 + $0x70] sm:$0xff]
        %v297 = vld [vmem:[%s279 + $0x78] sm:$0xff]
        %v298 = vld [vmem:[%s279 + $0x80] sm:$0xff]
        %v299 = vld [vmem:[%s279 + $0x88] sm:$0xff]
        %v300 = vld [vmem:[%s279 + $0x90] sm:$0xff]
        %v301 = vld [vmem:[%s279 + $0x98] sm:$0xff]
        %v302 = vld [vmem:[%s279 + $0xa0] sm:$0xff]
        %v303 = vld [vmem:[%s279 + $0xa8] sm:$0xff]
        %v304 = vld [vmem:[%s279 + $0xb0] sm:$0xff]
        %v305 = vld [vmem:[%s279 + $0xb8] sm:$0xff]
        %v306 = vld [vmem:[%s279 + $0xc0] sm:$0xff]
        %v307 = vld [vmem:[%s279 + $0xc8] sm:$0xff]
        %v308 = vld [vmem:[%s279 + $0xd0] sm:$0xff]
        %v309 = vld [vmem:[%s279 + $0xd8] sm:$0xff]
        %v310 = vld [vmem:[%s279 + $0xe0] sm:$0xff]
        %v311 = vld [vmem:[%s279 + $0xe8] sm:$0xff]
        %v312 = vld [vmem:[%s279 + $0xf0] sm:$0xff]
        %v313 = vld [vmem:[%s279 + $0xf8] sm:$0xff]
        %v314 = vld [vmem:[%s1] sm:$0xff]
        %v315 = vld [vmem:[%s1 + $0x8] sm:$0xff]
        %v316 = vld [vmem:[%s1 + $0x10] sm:$0xff]
        %v317 = vld [vmem:[%s1 + $0x18] sm:$0xff]
        %v318 = vld [vmem:[%s2] sm:$0x1]
        %v320 = vperm.slane %v318, 0
        %vm322 = vcmask 261120
        %v324 = vsel %vm322, %v282, 0
        %v327 = vsel %vm322, %v283, 0
        %v330 = vsel %vm322, %v284, 0
        %v333 = vsel %vm322, %v285, 0
        %v336 = vsel %vm322, %v286, 0
        %v339 = vsel %vm322, %v287, 0
        %v342 = vsel %vm322, %v288, 0
        %v345 = vsel %vm322, %v289, 0
        %v348 = vsel %vm322, %v290, 0
        %v351 = vsel %vm322, %v291, 0
        %v354 = vsel %vm322, %v292, 0
        %v357 = vsel %vm322, %v293, 0
        %v360 = vsel %vm322, %v294, 0
        %v363 = vsel %vm322, %v295, 0
        %v366 = vsel %vm322, %v296, 0
        %v369 = vsel %vm322, %v297, 0
        %v372 = vsel %vm322, %v298, 0
        %v375 = vsel %vm322, %v299, 0
        %v378 = vsel %vm322, %v300, 0
        %v381 = vsel %vm322, %v301, 0
        %v384 = vsel %vm322, %v302, 0
        %v387 = vsel %vm322, %v303, 0
        %v390 = vsel %vm322, %v304, 0
        %v393 = vsel %vm322, %v305, 0
        %v396 = vsel %vm322, %v306, 0
        %v399 = vsel %vm322, %v307, 0
        %v402 = vsel %vm322, %v308, 0
        %v405 = vsel %vm322, %v309, 0
        %v408 = vsel %vm322, %v310, 0
        %v411 = vsel %vm322, %v311, 0
        %v414 = vsel %vm322, %v312, 0
        %v417 = vsel %vm322, %v313, 0
        %419 = vmatpush.msra.mxu0 0.0
        %420 = vmatpush.msra.mxu0 0.0
        %421 = vmatpush.msra.mxu0 0.0
        %422 = vmatpush.msra.mxu0 0.0
        %423 = vmatpush.msra.mxu0 0.0
        %424 = vmatpush.msra.mxu0 0.0
        %425 = vmatpush.msra.mxu0 0.0
        %426 = vmatpush.msra.mxu0 0.0
        %427 = vmatpush.msra.mxu0 0.0
        %428 = vmatpush.msra.mxu0 0.0
        %429 = vmatpush.msra.mxu0 0.0
        %430 = vmatpush.msra.mxu0 0.0
        %431 = vmatpush.msra.mxu0 %v317
        %432 = vmatpush.msra.mxu0 %v316
        %433 = vmatpush.msra.mxu0 %v315
        %434 = vmatpush.msra.mxu0 %v314
        %435 = vmatmul.f32.gmra.mxu0 %v324
        %v436 = vpop.f32.mrf.mxu0
        %v437 = vadd.f32 %v320, %v436
        %438 = vmatmul.f32.gmra.mxu0 %v327
        %v439 = vpop.f32.mrf.mxu0
        %v440 = vadd.f32 %v320, %v439
        %441 = vmatmul.f32.gmra.mxu0 %v330
        %v442 = vpop.f32.mrf.mxu0
        %v443 = vadd.f32 %v320, %v442
        %444 = vmatmul.f32.gmra.mxu0 %v333
        %v445 = vpop.f32.mrf.mxu0
        %v446 = vadd.f32 %v320, %v445
        %447 = vmatmul.f32.gmra.mxu0 %v336
        %v448 = vpop.f32.mrf.mxu0
        %v449 = vadd.f32 %v320, %v448
        %450 = vmatmul.f32.gmra.mxu0 %v339
        %v451 = vpop.f32.mrf.mxu0
        %v452 = vadd.f32 %v320, %v451
        %453 = vmatmul.f32.gmra.mxu0 %v342
        %v454 = vpop.f32.mrf.mxu0
        %v455 = vadd.f32 %v320, %v454
        %456 = vmatmul.f32.gmra.mxu0 %v345
        %v457 = vpop.f32.mrf.mxu0
        %v458 = vadd.f32 %v320, %v457
        %459 = vmatmul.f32.gmra.mxu0 %v348
        %v460 = vpop.f32.mrf.mxu0
        %v461 = vadd.f32 %v320, %v460
        %462 = vmatmul.f32.gmra.mxu0 %v351
        %v463 = vpop.f32.mrf.mxu0
        %v464 = vadd.f32 %v320, %v463
        %465 = vmatmul.f32.gmra.mxu0 %v354
        %v466 = vpop.f32.mrf.mxu0
        %v467 = vadd.f32 %v320, %v466
        %468 = vmatmul.f32.gmra.mxu0 %v357
        %v469 = vpop.f32.mrf.mxu0
        %v470 = vadd.f32 %v320, %v469
        %471 = vmatmul.f32.gmra.mxu0 %v360
        %v472 = vpop.f32.mrf.mxu0
        %v473 = vadd.f32 %v320, %v472
        %474 = vmatmul.f32.gmra.mxu0 %v363
        %v475 = vpop.f32.mrf.mxu0
        %v476 = vadd.f32 %v320, %v475
        %477 = vmatmul.f32.gmra.mxu0 %v366
        %v478 = vpop.f32.mrf.mxu0
        %v479 = vadd.f32 %v320, %v478
        %480 = vmatmul.f32.gmra.mxu0 %v369
        %v481 = vpop.f32.mrf.mxu0
        %v482 = vadd.f32 %v320, %v481
        %483 = vmatmul.f32.gmra.mxu0 %v372
        %v484 = vpop.f32.mrf.mxu0
        %v485 = vadd.f32 %v320, %v484
        %486 = vmatmul.f32.gmra.mxu0 %v375
        %v487 = vpop.f32.mrf.mxu0
        %v488 = vadd.f32 %v320, %v487
        %489 = vmatmul.f32.gmra.mxu0 %v378
        %v490 = vpop.f32.mrf.mxu0
        %v491 = vadd.f32 %v320, %v490
        %492 = vmatmul.f32.gmra.mxu0 %v381
        %v493 = vpop.f32.mrf.mxu0
        %v494 = vadd.f32 %v320, %v493
        %495 = vmatmul.f32.gmra.mxu0 %v384
        %v496 = vpop.f32.mrf.mxu0
        %v497 = vadd.f32 %v320, %v496
        %498 = vmatmul.f32.gmra.mxu0 %v387
        %v499 = vpop.f32.mrf.mxu0
        %v500 = vadd.f32 %v320, %v499
        %501 = vmatmul.f32.gmra.mxu0 %v390
        %v502 = vpop.f32.mrf.mxu0
        %v503 = vadd.f32 %v320, %v502
        %504 = vmatmul.f32.gmra.mxu0 %v393
        %v505 = vpop.f32.mrf.mxu0
        %v506 = vadd.f32 %v320, %v505
        %507 = vmatmul.f32.gmra.mxu0 %v396
        %v508 = vpop.f32.mrf.mxu0
        %v509 = vadd.f32 %v320, %v508
        %510 = vmatmul.f32.gmra.mxu0 %v399
        %v511 = vpop.f32.mrf.mxu0
        %v512 = vadd.f32 %v320, %v511
        %513 = vmatmul.f32.gmra.mxu0 %v402
        %v514 = vpop.f32.mrf.mxu0
        %v515 = vadd.f32 %v320, %v514
        %516 = vmatmul.f32.gmra.mxu0 %v405
        %v517 = vpop.f32.mrf.mxu0
        %v518 = vadd.f32 %v320, %v517
        %519 = vmatmul.f32.gmra.mxu0 %v408
        %v520 = vpop.f32.mrf.mxu0
        %v521 = vadd.f32 %v320, %v520
        %522 = vmatmul.f32.gmra.mxu0 %v411
        %v523 = vpop.f32.mrf.mxu0
        %v524 = vadd.f32 %v320, %v523
        %525 = vmatmul.f32.gmra.mxu0 %v414
        %v526 = vpop.f32.mrf.mxu0
        %v527 = vadd.f32 %v320, %v526
        %528 = vmatmul.f32.gmra.mxu0 %v417
        %v529 = vpop.f32.mrf.mxu0
        %v530 = vadd.f32 %v320, %v529
        %531 = vdwg.mxu0
        %v532 = vmax.f32 %v437, 0.0
        %v533 = vmax.f32 %v440, 0.0
        %v534 = vmax.f32 %v443, 0.0
        %v535 = vmax.f32 %v446, 0.0
        %v536 = vmax.f32 %v449, 0.0
        %v537 = vmax.f32 %v452, 0.0
        %v538 = vmax.f32 %v455, 0.0
        %v539 = vmax.f32 %v458, 0.0
        %v540 = vmax.f32 %v461, 0.0
        %v541 = vmax.f32 %v464, 0.0
        %v542 = vmax.f32 %v467, 0.0
        %v543 = vmax.f32 %v470, 0.0
        %v544 = vmax.f32 %v473, 0.0
        %v545 = vmax.f32 %v476, 0.0
        %v546 = vmax.f32 %v479, 0.0
        %v547 = vmax.f32 %v482, 0.0
        %v548 = vmax.f32 %v485, 0.0
        %v549 = vmax.f32 %v488, 0.0
        %v550 = vmax.f32 %v491, 0.0
        %v551 = vmax.f32 %v494, 0.0
        %v552 = vmax.f32 %v497, 0.0
        %v553 = vmax.f32 %v500, 0.0
        %v554 = vmax.f32 %v503, 0.0
        %v555 = vmax.f32 %v506, 0.0
        %v556 = vmax.f32 %v509, 0.0
        %v557 = vmax.f32 %v512, 0.0
        %v558 = vmax.f32 %v515, 0.0
        %v559 = vmax.f32 %v518, 0.0
        %v560 = vmax.f32 %v521, 0.0
        %v561 = vmax.f32 %v524, 0.0
        %v562 = vmax.f32 %v527, 0.0
        %v563 = vmax.f32 %v530, 0.0
        %v564 = vld [vmem:[%s3] sm:$0xff]
        %v565 = vld [vmem:[%s3 + $0x8] sm:$0xff]
        %v566 = vld [vmem:[%s3 + $0x10] sm:$0xff]
        %v567 = vld [vmem:[%s3 + $0x18] sm:$0xff]
        %v568 = vld [vmem:[%s3 + $0x20] sm:$0xff]
        %v569 = vld [vmem:[%s3 + $0x28] sm:$0xff]
        %v570 = vld [vmem:[%s3 + $0x30] sm:$0xff]
        %v571 = vld [vmem:[%s3 + $0x38] sm:$0xff]
        %v572 = vld [vmem:[%s3 + $0x40] sm:$0xff]
        %v573 = vld [vmem:[%s3 + $0x48] sm:$0xff]
        %v574 = vld [vmem:[%s3 + $0x50] sm:$0xff]
        %v575 = vld [vmem:[%s3 + $0x58] sm:$0xff]
        %v576 = vld [vmem:[%s3 + $0x60] sm:$0xff]
        %v577 = vld [vmem:[%s3 + $0x68] sm:$0xff]
        %v578 = vld [vmem:[%s3 + $0x70] sm:$0xff]
        %v579 = vld [vmem:[%s3 + $0x78] sm:$0xff]
        %v580 = vld [vmem:[%s4] sm:$0x1]
        %v582 = vperm.slane %v580, 0
        %584 = vmatpush.msra.mxu0 %v579
        %585 = vmatpush.msra.mxu0 %v578
        %586 = vmatpush.msra.mxu0 %v577
        %587 = vmatpush.msra.mxu0 %v576
        %588 = vmatpush.msra.mxu0 %v575
        %589 = vmatpush.msra.mxu0 %v574
        %590 = vmatpush.msra.mxu0 %v573
        %591 = vmatpush.msra.mxu0 %v572
        %592 = vmatpush.msra.mxu0 %v571
        %593 = vmatpush.msra.mxu0 %v570
        %594 = vmatpush.msra.mxu0 %v569
        %595 = vmatpush.msra.mxu0 %v568
        %596 = vmatpush.msra.mxu0 %v567
        %597 = vmatpush.msra.mxu0 %v566
        %598 = vmatpush.msra.mxu0 %v565
        %599 = vmatpush.msra.mxu0 %v564
        %600 = vmatmul.f32.gmra.mxu0 %v532
        %v601 = vpop.f32.mrf.mxu0
        %v602 = vadd.f32 %v582, %v601
        %603 = vmatmul.f32.gmra.mxu0 %v533
        %v604 = vpop.f32.mrf.mxu0
        %v605 = vadd.f32 %v582, %v604
        %606 = vmatmul.f32.gmra.mxu0 %v534
        %v607 = vpop.f32.mrf.mxu0
        %v608 = vadd.f32 %v582, %v607
        %609 = vmatmul.f32.gmra.mxu0 %v535
        %v610 = vpop.f32.mrf.mxu0
        %v611 = vadd.f32 %v582, %v610
        %612 = vmatmul.f32.gmra.mxu0 %v536
        %v613 = vpop.f32.mrf.mxu0
        %v614 = vadd.f32 %v582, %v613
        %615 = vmatmul.f32.gmra.mxu0 %v537
        %v616 = vpop.f32.mrf.mxu0
        %v617 = vadd.f32 %v582, %v616
        %618 = vmatmul.f32.gmra.mxu0 %v538
        %v619 = vpop.f32.mrf.mxu0
        %v620 = vadd.f32 %v582, %v619
        %621 = vmatmul.f32.gmra.mxu0 %v539
        %v622 = vpop.f32.mrf.mxu0
        %v623 = vadd.f32 %v582, %v622
        %624 = vmatmul.f32.gmra.mxu0 %v540
        %v625 = vpop.f32.mrf.mxu0
        %v626 = vadd.f32 %v582, %v625
        %627 = vmatmul.f32.gmra.mxu0 %v541
        %v628 = vpop.f32.mrf.mxu0
        %v629 = vadd.f32 %v582, %v628
        %630 = vmatmul.f32.gmra.mxu0 %v542
        %v631 = vpop.f32.mrf.mxu0
        %v632 = vadd.f32 %v582, %v631
        %633 = vmatmul.f32.gmra.mxu0 %v543
        %v634 = vpop.f32.mrf.mxu0
        %v635 = vadd.f32 %v582, %v634
        %636 = vmatmul.f32.gmra.mxu0 %v544
        %v637 = vpop.f32.mrf.mxu0
        %v638 = vadd.f32 %v582, %v637
        %639 = vmatmul.f32.gmra.mxu0 %v545
        %v640 = vpop.f32.mrf.mxu0
        %v641 = vadd.f32 %v582, %v640
        %642 = vmatmul.f32.gmra.mxu0 %v546
        %v643 = vpop.f32.mrf.mxu0
        %v644 = vadd.f32 %v582, %v643
        %645 = vmatmul.f32.gmra.mxu0 %v547
        %v646 = vpop.f32.mrf.mxu0
        %v647 = vadd.f32 %v582, %v646
        %648 = vmatmul.f32.gmra.mxu0 %v548
        %v649 = vpop.f32.mrf.mxu0
        %v650 = vadd.f32 %v582, %v649
        %651 = vmatmul.f32.gmra.mxu0 %v549
        %v652 = vpop.f32.mrf.mxu0
        %v653 = vadd.f32 %v582, %v652
        %654 = vmatmul.f32.gmra.mxu0 %v550
        %v655 = vpop.f32.mrf.mxu0
        %v656 = vadd.f32 %v582, %v655
        %657 = vmatmul.f32.gmra.mxu0 %v551
        %v658 = vpop.f32.mrf.mxu0
        %v659 = vadd.f32 %v582, %v658
        %660 = vmatmul.f32.gmra.mxu0 %v552
        %v661 = vpop.f32.mrf.mxu0
        %v662 = vadd.f32 %v582, %v661
        %663 = vmatmul.f32.gmra.mxu0 %v553
        %v664 = vpop.f32.mrf.mxu0
        %v665 = vadd.f32 %v582, %v664
        %666 = vmatmul.f32.gmra.mxu0 %v554
        %v667 = vpop.f32.mrf.mxu0
        %v668 = vadd.f32 %v582, %v667
        %669 = vmatmul.f32.gmra.mxu0 %v555
        %v670 = vpop.f32.mrf.mxu0
        %v671 = vadd.f32 %v582, %v670
        %672 = vmatmul.f32.gmra.mxu0 %v556
        %v673 = vpop.f32.mrf.mxu0
        %v674 = vadd.f32 %v582, %v673
        %675 = vmatmul.f32.gmra.mxu0 %v557
        %v676 = vpop.f32.mrf.mxu0
        %v677 = vadd.f32 %v582, %v676
        %678 = vmatmul.f32.gmra.mxu0 %v558
        %v679 = vpop.f32.mrf.mxu0
        %v680 = vadd.f32 %v582, %v679
        %681 = vmatmul.f32.gmra.mxu0 %v559
        %v682 = vpop.f32.mrf.mxu0
        %v683 = vadd.f32 %v582, %v682
        %684 = vmatmul.f32.gmra.mxu0 %v560
        %v685 = vpop.f32.mrf.mxu0
        %v686 = vadd.f32 %v582, %v685
        %687 = vmatmul.f32.gmra.mxu0 %v561
        %v688 = vpop.f32.mrf.mxu0
        %v689 = vadd.f32 %v582, %v688
        %690 = vmatmul.f32.gmra.mxu0 %v562
        %v691 = vpop.f32.mrf.mxu0
        %v692 = vadd.f32 %v582, %v691
        %693 = vmatmul.f32.gmra.mxu0 %v563
        %v694 = vpop.f32.mrf.mxu0
        %v695 = vadd.f32 %v582, %v694
        %696 = vdwg.mxu0
        %v697 = vmax.f32 %v602, 0.0
        %v698 = vmax.f32 %v605, 0.0
        %v699 = vmax.f32 %v608, 0.0
        %v700 = vmax.f32 %v611, 0.0
        %v701 = vmax.f32 %v614, 0.0
        %v702 = vmax.f32 %v617, 0.0
        %v703 = vmax.f32 %v620, 0.0
        %v704 = vmax.f32 %v623, 0.0
        %v705 = vmax.f32 %v626, 0.0
        %v706 = vmax.f32 %v629, 0.0
        %v707 = vmax.f32 %v632, 0.0
        %v708 = vmax.f32 %v635, 0.0
        %v709 = vmax.f32 %v638, 0.0
        %v710 = vmax.f32 %v641, 0.0
        %v711 = vmax.f32 %v644, 0.0
        %v712 = vmax.f32 %v647, 0.0
        %v713 = vmax.f32 %v650, 0.0
        %v714 = vmax.f32 %v653, 0.0
        %v715 = vmax.f32 %v656, 0.0
        %v716 = vmax.f32 %v659, 0.0
        %v717 = vmax.f32 %v662, 0.0
        %v718 = vmax.f32 %v665, 0.0
        %v719 = vmax.f32 %v668, 0.0
        %v720 = vmax.f32 %v671, 0.0
        %v721 = vmax.f32 %v674, 0.0
        %v722 = vmax.f32 %v677, 0.0
        %v723 = vmax.f32 %v680, 0.0
        %v724 = vmax.f32 %v683, 0.0
        %v725 = vmax.f32 %v686, 0.0
        %v726 = vmax.f32 %v689, 0.0
        %v727 = vmax.f32 %v692, 0.0
        %v728 = vmax.f32 %v695, 0.0
        %v729 = vld [vmem:[%s5] sm:$0xff]
        %730 = vmatpush.xpose.msra.mxu0 %v712
        %731 = vmatpush.xpose.msra.mxu0 %v711
        %732 = vmatpush.xpose.msra.mxu0 %v710
        %733 = vmatpush.xpose.msra.mxu0 %v709
        %734 = vmatpush.xpose.msra.mxu0 %v708
        %735 = vmatpush.xpose.msra.mxu0 %v707
        %736 = vmatpush.xpose.msra.mxu0 %v706
        %737 = vmatpush.xpose.msra.mxu0 %v705
        %738 = vmatpush.xpose.msra.mxu0 %v704
        %739 = vmatpush.xpose.msra.mxu0 %v703
        %740 = vmatpush.xpose.msra.mxu0 %v702
        %741 = vmatpush.xpose.msra.mxu0 %v701
        %742 = vmatpush.xpose.msra.mxu0 %v700
        %743 = vmatpush.xpose.msra.mxu0 %v699
        %744 = vmatpush.xpose.msra.mxu0 %v698
        %745 = vmatpush.xpose.msra.mxu0 %v697
        %746 = vmatmul.f32.gmra.mxu0 %v729
        %v747 = vpop.f32.mrf.mxu0
        %v748 = vadd.f32 0.0, %v747
        %749 = vdwg.mxu0
        %750 = vmatpush.xpose.msra.mxu0 %v728
        %751 = vmatpush.xpose.msra.mxu0 %v727
        %752 = vmatpush.xpose.msra.mxu0 %v726
        %753 = vmatpush.xpose.msra.mxu0 %v725
        %754 = vmatpush.xpose.msra.mxu0 %v724
        %755 = vmatpush.xpose.msra.mxu0 %v723
        %756 = vmatpush.xpose.msra.mxu0 %v722
        %757 = vmatpush.xpose.msra.mxu0 %v721
        %758 = vmatpush.xpose.msra.mxu0 %v720
        %759 = vmatpush.xpose.msra.mxu0 %v719
        %760 = vmatpush.xpose.msra.mxu0 %v718
        %761 = vmatpush.xpose.msra.mxu0 %v717
        %762 = vmatpush.xpose.msra.mxu0 %v716
        %763 = vmatpush.xpose.msra.mxu0 %v715
        %764 = vmatpush.xpose.msra.mxu0 %v714
        %765 = vmatpush.xpose.msra.mxu0 %v713
        %766 = vmatmul.f32.gmra.mxu0 %v729
        %v767 = vpop.f32.mrf.mxu0
        %v768 = vadd.f32 0.0, %v767
        %769 = vdwg.mxu0
        %v770 = vld [vmem:[#allocation2] sm:$0x1]
        %772 = vset.pattern.permute.xlu0 0
        %773 = vperm.xlu0 %772, %v770
        %v774 = vpop.permute.xlu0 %773
        %v776 = vperm.slane %v774, 0
        %v777 = vadd.f32 %v748, %v776
        %v778 = vadd.f32 %v768, %v776
        %v779 = vxor.u32 %v777, 2147483648
        %v780 = vxor.u32 %v778, 2147483648
        %v781 = vmul.f32 %v779, 1.442695
        %v782 = vpow.pop %v781
        %v783 = vmul.f32 %v780, 1.442695
        %v784 = vpow.pop %v783
        %v785 = vadd.f32 %v782, 1.0
        %v786 = vadd.f32 %v784, 1.0
        %v787 = vrcp.pop %v785
        %v788 = vmul.f32 %v785, %v787
        %v789 = vsub.f32 1.0, %v788
        %v790 = vmul.f32 %v787, %v789
        %v791 = vadd.f32 %v787, %v790
        %vm792 = vweird.f32 %v785
        %vm793 = vweird.f32 %v787
        %vm794 = vmor %vm792, %vm793
        %v795 = vsel %vm794, %v787, %v791
        %v796 = vand.u32 2147483647, %v785
        %vm797 = vcmp.eq.f32.partialorder %v796, 8.507059e+37
        %v798 = vand.u32 %v785, 2147483648
        %v799 = vor.u32 1.1754944e-38, %v798
        %v800 = vsel %vm797, %v799, %v795
        %v801 = vmul.f32 1.0, %v800
        %v802 = vrcp.pop %v786
        %v803 = vmul.f32 %v786, %v802
        %v804 = vsub.f32 1.0, %v803
        %v805 = vmul.f32 %v802, %v804
        %v806 = vadd.f32 %v802, %v805
        %vm807 = vweird.f32 %v786
        %vm808 = vweird.f32 %v802
        %vm809 = vmor %vm807, %vm808
        %v810 = vsel %vm809, %v802, %v806
        %v811 = vand.u32 2147483647, %v786
        %vm812 = vcmp.eq.f32.partialorder %v811, 8.507059e+37
        %v813 = vand.u32 %v786, 2147483648
        %v814 = vor.u32 1.1754944e-38, %v813
        %v815 = vsel %vm812, %v814, %v810
        %v816 = vmul.f32 1.0, %v815
        %v819 = vrot.slane %v816, 7
        %vm820 = vcmask 1040384
        %v821 = vsel %vm820, %v801, %v819
        %v823 = vlaneseq
        %vm824 = vcmp.ge.s32.totalorder %v823, 0
        %vm825 = vcmp.lt.s32.totalorder %v823, 256
        %vm826 = vmand %vm824, %vm825
        %827 = vst.msk [vmem:[%s274] sm:$0x3] %vm826, %v821
        %s828 = sand.u32 %s183, 1
        %s829 = scalar_lea.sflag [#allocation4], %s828
        %s830 = sand.u32 %s183, 1
        %s831 = smul.addr %s830, 2
        %s832 = scalar_lea.vmem [#allocation3], %s831
        // Predicated region
        $region49: #{tpu_custom_call.1} parent=47 // pred_check
          %p833 = pneg %p193
        $region50: #{tpu_custom_call.1} parent=47 // pred_check_branch
          %835 = sbr.rel (%p833) target = $region52
        $region51: #{tpu_custom_call.1} parent=47 // pred_region
          %s836 = smul.u32 2, %s23
          %838 = vsyncadd %s829, 0
          %s839 = scalar_lea.hbm %s7, %s836
          %s841 = sshll.u32 %s832, 4
          %s842 = int_to_ptr.vmem [resolvable:$true] %s841
          %s843 = sshll.u32 %s839, 4
          %s844 = int_to_ptr.hbm [resolvable:$true] %s843
          %846 = dma.vmem_to_hbm [thread:$0]  %s842, 32, %s844, %s829
        $region52: #{tpu_custom_call.1} parent=47 // pred_fallthru
          _
      $region48: #{tpu_custom_call.1} parent=5 // pred_fallthru
        _
      %p847 = scmp.le.s32.totalorder 2, %s18
      // Predicated region
      $region53: #{tpu_custom_call.1} parent=5 // pred_check
        %p848 = pneg %p847
      $region54: #{tpu_custom_call.1} parent=5 // pred_check_branch
        %850 = sbr.rel (%p848) target = $region56
      $region55: #{tpu_custom_call.1} parent=5 // pred_region
        %s851 = ssub.s32 %s18, 2
        // Predicated region
        $region57: #{tpu_custom_call.1} parent=55 // pred_check
          %p852 = pneg %p199
        $region58: #{tpu_custom_call.1} parent=55 // pred_check_branch
          %854 = sbr.rel (%p852) target = $region60
        $region59: #{tpu_custom_call.1} parent=55 // pred_region
          %s855 = sand.u32 %s184, 1
          %s856 = scalar_lea.sflag [#allocation4], %s855
          %s857 = sand.u32 %s184, 1
          %s858 = smul.addr %s857, 2
          %s859 = scalar_lea.vmem [#allocation3], %s858
          %861 = dma.done %s856, 32
        $region60: #{tpu_custom_call.1} parent=55 // pred_fallthru
          _
      $region56: #{tpu_custom_call.1} parent=5 // pred_fallthru
        _
    $region6: #{tpu_custom_call.1} parent=1 // loop_footer
      %s22 = sadd.s32 1, %s18
    $region7: #{tpu_custom_call.1} parent=1 // loop_footer_branch
      %17 = sbr.rel target = $region3
    $region8: #{tpu_custom_call.1} parent=1 // loop_exit
      _
    %862 = vsyncpa [#allocation4], 1
    %s863 = scalar_lea.sflag [#allocation4], 1
    %864 = vsyncpa %s863, 1

</llo_original>
